<compile_context>
chip_gen: v5e
topology: v5e:2x2
jax: 0.10.0
libtpu: 0.0.40
codegen_flags: <defaults>
</compile_context>

<pallas_src>
import jax
import jax.numpy as jnp
from jax.experimental import pallas as pl
from jax.experimental.pallas import tpu as pltpu  # noqa: F401

# ------------------------- hyper-parameters -------------------------
NZ = 32            # opt.nz
NGF = 16           # opt.ngf
NC = 3             # image channels
NSIZE = 32         # opt.imageSize
NTIMESTEP = 3      # opt.ntimestep
BATCH = 2
MAXOBJSCALE = 2.0  # opt.maxobjscale
ROT = 0.5          # global `rot` used by clampT
BN_EPS = 1e-5


def _round_up(x, m):
    return ((x + m - 1) // m) * m


# ------------------------- Pallas MXU kernel -------------------------
def _sigmoid_f32(y):
    # explicit formula (EUP exp + divide) — avoids relying on a logistic lowering
    return 1.0 / (1.0 + jnp.exp(-y))


def _head_act(y):
    # fused Gfgi/Gfgm head: columns ordered (r, s, cout), cout = [fgi0..2, fgm]
    col = jax.lax.broadcasted_iota(jnp.int32, y.shape, 1)
    is_mask_col = jnp.bitwise_and(col, NC) == NC      # (NC + 1) == 4 is a power of two
    return jnp.where(is_mask_col, _sigmoid_f32(y), jnp.tanh(y))


_ACTS = {
    'none': lambda y: y,
    'tanh': jnp.tanh,
    'head': _head_act,
}


def make_dense(w_mat, bias):
    """Pre-pad a (K, N) weight to (Kp, Np) bf16 and bias to (1, Np) f32 at init time."""
    w_mat = jnp.asarray(w_mat, jnp.float32)
    K, N = w_mat.shape
    Kp, Np = _round_up(K, 128), _round_up(N, 128)
    w = jnp.pad(w_mat, ((0, Kp - K), (0, Np - N))).astype(jnp.bfloat16)
    b = jnp.zeros((N,), jnp.float32) if bias is None else jnp.asarray(bias, jnp.float32)
    b = jnp.pad(b, (0, Np - N)).reshape(1, Np)
    return dict(w=w, b=b, k=K, n=N)


def matmul_act(a, dense, act='none'):
    """(M, Kp) bf16 activations x pre-padded bf16 weight on the MXU, f32 accumulate,
    bias + activation fused in the epilogue, and the logical N columns sliced
    in-kernel so padded lanes are never stored to HBM.

    Single full-size block (grid=(1,)): every matmul in this model is far below
    VMEM limits on v5e/v6e/v7x and per-grid-step overhead dominates any M split."""
    a = a.astype(jnp.bfloat16)
    M, Kp = a.shape
    Kw, Np = dense['w'].shape
    assert Kp == Kw, (Kp, Kw)
    N = dense['n']
    act_fn = _ACTS[act]

    Mp = _round_up(M, 16)                       # bf16 sublane tile
    if Mp != M:
        a = jnp.pad(a, ((0, Mp - M), (0, 0)))

    def kernel(a_ref, w_ref, b_ref, o_ref):
        acc = jnp.dot(a_ref[...], w_ref[...], preferred_element_type=jnp.float32)
        y = act_fn(acc + b_ref[...])            # f32 epilogue (v5e-safe)
        if N != Np:
            y = y[:, :N]                        # drop padded lanes before the store
        o_ref[...] = y

    out = pl.pallas_call(
        kernel,
        out_shape=jax.ShapeDtypeStruct((Mp, N), jnp.float32),
        grid=(1,),
        in_specs=[pl.BlockSpec((Mp, Kp), lambda i: (0, 0)),
                  pl.BlockSpec((Kp, Np), lambda i: (0, 0)),
                  pl.BlockSpec((1, Np), lambda i: (0, 0))],
        out_specs=pl.BlockSpec((Mp, N), lambda i: (0, 0)),
    )(a, dense['w'], dense['b'])
    return out if Mp == M else out[:M]


# ------------------------- deconv (matmul-backed, NHWC) -------------------------
# (phase r, im2col offset u, kernel tap ky) for stride-2, k=4, pad=1 transpose conv:
# output row 2*i + r receives input row (i - 1 + u) through kernel tap ky.
_ROW_MAP = ((0, 0, 3), (0, 1, 1), (1, 1, 2), (1, 2, 0))


def _subpixel_weight(w):
    """PyTorch ConvTranspose2d(Cin, Cout, 4, stride=2, pad=1) weight (Cin,Cout,4,4)
    -> (9*Cin, 4*Cout) matrix.  Rows ordered (u, v, cin) to match the NHWC im2col,
    columns ordered (r, s, cout) to match the pixel shuffle."""
    w = jnp.asarray(w, jnp.float32)
    Cin, Cout = w.shape[0], w.shape[1]
    Wf = jnp.zeros((3, 3, Cin, 2, 2, Cout), jnp.float32)
    for (r, u, ky) in _ROW_MAP:
        for (s, v, kx) in _ROW_MAP:
            Wf = Wf.at[u, v, :, r, s, :].set(w[:, :, ky, kx])
    return Wf.reshape(9 * Cin, 4 * Cout)


def deconv_s2_apply(x, dense, cout, act='none'):
    """ConvTranspose2d(k=4, s=2, p=1) on an NHWC input via the regrouped matmul
    + pixel shuffle.  The im2col is channel-last (lane-dense), built directly in
    bf16, with the K zero-pad slab appended inside the same concat."""
    B, H, W, Cin = x.shape
    xp = jnp.pad(x, ((0, 0), (1, 1), (1, 1), (0, 0))).astype(jnp.bfloat16)
    K = 9 * Cin
    Kp = _round_up(K, 128)
    slices = [xp[:, u:u + H, v:v + W, :] for u in range(3) for v in range(3)]
    if Kp != K:
        slices.append(jnp.zeros((B, H, W, Kp - K), jnp.bfloat16))
    cols = jnp.concatenate(slices, axis=-1).reshape(B * H * W, Kp)
    out = matmul_act(cols, dense, act)                     # (B*H*W, 4*cout) f32
    out = out.reshape(B, H, W, 2, 2, cout)
    # pixel shuffle (lane dim = cout stays in lanes): (B, H, r, W, s, C) -> (B, 2H, 2W, C)
    return out.transpose(0, 1, 3, 2, 4, 5).reshape(B, 2 * H, 2 * W, cout)


# ------------------------- norms / pooling -------------------------
def batchnorm_nhwc(x, gamma, beta):
    # training-mode BN (batch statistics, biased variance), as in the train script
    mean = jnp.mean(x, axis=(0, 1, 2), keepdims=True)
    var = jnp.var(x, axis=(0, 1, 2), keepdims=True)
    return (x - mean) * jax.lax.rsqrt(var + BN_EPS) * gamma + beta


def batchnorm1d(x, gamma, beta):
    mean = jnp.mean(x, axis=0, keepdims=True)
    var = jnp.var(x, axis=0, keepdims=True)
    return (x - mean) * jax.lax.rsqrt(var + BN_EPS) * gamma + beta


def apply_encoder_conv(stages, x):
    """AvgPool2d(4,2,1) (count_include_pad) + BN + LeakyReLU(0.2) per stage, NHWC.
    One reduce_window per pool instead of 16 lane-strided slice+adds."""
    # TODO(synk): the 2x16x16x64 encoder input would fit a single fused Pallas VPU
    # block, but stride-2 windows are left to lax.reduce_window here (1 op/stage).
    for st in stages:
        x = jax.lax.reduce_window(
            x, 0.0, jax.lax.add,
            window_dimensions=(1, 4, 4, 1), window_strides=(1, 2, 2, 1),
            padding=((0, 0), (1, 1), (1, 1), (0, 0))) * (1.0 / 16.0)
        x = batchnorm_nhwc(x, st['gamma'], st['beta'])
        x = jnp.where(x >= 0, x, 0.2 * x)
    return x


# ------------------------- small (M<=8) dense blocks: plain jnp -------------------------
def lstm_cell(x, h, c, p):
    """PyTorch nn.LSTMCell semantics (gate order i, f, g, o); M=B=2 -> jnp."""
    gates = jnp.concatenate([x, h], axis=1) @ p['w'] + p['b']
    i, f, g, o = jnp.split(gates, 4, axis=1)
    c_new = jax.nn.sigmoid(f) * c + jax.nn.sigmoid(i) * jnp.tanh(g)
    h_new = jax.nn.sigmoid(o) * jnp.tanh(c_new)
    return h_new, c_new


def fc_bn_tanh(x, p):
    return jnp.tanh(batchnorm1d(x @ p['w'] + p['b'], p['gamma'], p['beta']))


# ------------------------- AffineGridGen / STNM -------------------------
def affine_grid(theta, H, W):
    """LR-GAN AffineGridGen: base channel0 = row coord, channel1 = col coord
    (both -1 + 2k/size), channel2 = 1; out = base @ theta^T."""
    # TODO(synk): the grid-gen (-1 + 2k/size) vs sampler ((g+1)*(size-1)/2) convention
    # mix is kept verbatim from the original AffineGridGen + STNM CUDA pair.
    ys = jnp.arange(H, dtype=jnp.float32) * (2.0 / H) - 1.0
    xs = jnp.arange(W, dtype=jnp.float32) * (2.0 / W) - 1.0
    gy, gx = jnp.meshgrid(ys, xs, indexing='ij')
    base = jnp.stack([gy, gx, jnp.ones_like(gy)], axis=-1)     # (H, W, 3)
    return jnp.einsum('ijm,bkm->bijk', base, theta)            # (B, H, W, 2)


def stnm_composite(canvas, fgim, grid):
    """STNM compositor, all NHWC.  `fgim` packs [fgi(3ch), fgm(1ch)] so the bilinear
    sampling gathers once per corner (4 take_along_axis calls total); blend stays in
    jnp so XLA fuses it with the gather epilogue."""
    B, H, W, C = fgim.shape
    y = (grid[..., 0] + 1.0) * (H - 1) / 2.0
    x = (grid[..., 1] + 1.0) * (W - 1) / 2.0
    x0 = jnp.floor(x)
    y0 = jnp.floor(y)
    dx = x - x0
    dy = y - y0
    flat = fgim.reshape(B, H * W, C)

    # TODO(synk): the data-dependent bilinear gather has no clean Pallas TPU
    # equivalent; it stays as jnp.take_along_axis glue.
    def corner(iy, ix):
        valid = ((ix >= 0) & (ix <= W - 1) & (iy >= 0) & (iy <= H - 1)
                 ).astype(jnp.float32)
        idx = (jnp.clip(iy, 0, H - 1).astype(jnp.int32) * W
               + jnp.clip(ix, 0, W - 1).astype(jnp.int32)).reshape(B, H * W, 1)
        v = jnp.take_along_axis(flat, idx, axis=1).reshape(B, H, W, C)
        return v * valid[..., None]

    v00 = corner(y0, x0)
    v01 = corner(y0, x0 + 1)
    v10 = corner(y0 + 1, x0)
    v11 = corner(y0 + 1, x0 + 1)
    w00 = ((1 - dy) * (1 - dx))[..., None]
    w01 = ((1 - dy) * dx)[..., None]
    w10 = (dy * (1 - dx))[..., None]
    w11 = (dy * dx)[..., None]
    samp = w00 * v00 + w01 * v01 + w10 * v10 + w11 * v11
    fg_s, m_s = samp[..., :NC], samp[..., NC:NC + 1]
    return m_s * fg_s + (1.0 - m_s) * canvas


def clamp_T(t):
    x_s = jnp.clip(t[:, 0], MAXOBJSCALE, 2 * MAXOBJSCALE)
    x_r = jnp.clip(t[:, 1], -ROT, ROT)
    x_t = jnp.clip(t[:, 2], -1.0, 1.0)
    y_r = jnp.clip(t[:, 3], -ROT, ROT)
    y_s = jnp.clip(t[:, 4], MAXOBJSCALE, 2 * MAXOBJSCALE)
    y_t = jnp.clip(t[:, 5], -1.0, 1.0)
    return jnp.stack([x_s, x_r, x_t, y_r, y_s, y_t], axis=1)


# ------------------------- parameters -------------------------
def init_params(key):
    keys = iter(jax.random.split(key, 64))

    def nrm(shape, scale=0.05):
        return scale * jax.random.normal(next(keys), shape, dtype=jnp.float32)

    params = {}

    # nn.LSTMCell(nz, nz): pre-fuse [W_ih | W_hh]^T and b_ih + b_hh (jnp-side).
    w_ih, w_hh = nrm((4 * NZ, NZ)), nrm((4 * NZ, NZ))
    b_ih, b_hh = nrm((4 * NZ,)), nrm((4 * NZ,))
    params['lstm'] = dict(w=jnp.concatenate([w_ih, w_hh], axis=1).T, b=b_ih + b_hh)

    def build_deconv_stack(first_out, use_bias):
        # first layer: ConvTranspose2d(nz, first_out, 4, 4, 0) from a 1x1 input
        # == plain matmul with columns ordered (ky, kx, cout)  -> NHWC reshape
        w0 = nrm((NZ, first_out, 4, 4))
        b0 = nrm((first_out,)) if use_bias else None
        layers = [dict(kind='first', cout=first_out,
                       w=w0.transpose(0, 2, 3, 1).reshape(NZ, 16 * first_out),
                       b=(jnp.zeros((16 * first_out,), jnp.float32) if b0 is None
                          else jnp.tile(b0, 16)),
                       gamma=jnp.ones((first_out,), jnp.float32),
                       beta=jnp.zeros((first_out,), jnp.float32))]
        size_map, depth_in, depth_out = 4, first_out, first_out // 2
        while size_map < NSIZE // 2:
            w = nrm((depth_in, depth_out, 4, 4))
            b = nrm((depth_out,)) if use_bias else None
            layers.append(dict(kind='s2', cout=depth_out,
                               dense=make_dense(_subpixel_weight(w),
                                                None if b is None else jnp.tile(b, 4)),
                               gamma=jnp.ones((depth_out,), jnp.float32),
                               beta=jnp.zeros((depth_out,), jnp.float32)))
            depth_in = depth_out
            depth_out = max(depth_in // 2, 64)
            size_map *= 2
        return layers, depth_in

    params['gbgc'], depth_in_bg = build_deconv_stack(4 * NGF, True)   # Gbgc
    params['gfgc'], depth_in = build_deconv_stack(8 * NGF, False)     # Gfgc
    # with NSIZE=32, NGF=16 both stacks end at 64 channels (required by encoderconv)
    assert depth_in_bg == depth_in == 64

    # Gbgi head: ConvTranspose2d(64, nc, 4, 2, 1, bias=True) + Tanh (tanh fused in-kernel)
    params['gbgi'] = make_dense(_subpixel_weight(nrm((depth_in_bg, NC, 4, 4))),
                                jnp.tile(nrm((NC,)), 4))

    # Fused Gfgi (nc ch, no bias, Tanh) + Gfgm (1 ch, bias, Sigmoid) head: 4 channels.
    w_fgi = nrm((depth_in, NC, 4, 4))
    w_fgm, b_fgm = nrm((depth_in, 1, 4, 4)), nrm((1,))
    w_head = jnp.concatenate([w_fgi, w_fgm], axis=1)          # (Cin, nc+1, 4, 4)
    b_head = jnp.concatenate([jnp.zeros((NC,), jnp.float32), b_fgm])
    params['gfghead'] = make_dense(_subpixel_weight(w_head), jnp.tile(b_head, 4))

    # Gtransform: Linear(nz, 6), zero weight, bias[0]=bias[4]=maxobjscale (jnp-side)
    params['gtransform'] = dict(
        w=jnp.zeros((NZ, 6), jnp.float32),
        b=jnp.zeros((6,), jnp.float32).at[0].set(MAXOBJSCALE).at[4].set(MAXOBJSCALE))

    # encoderconv: AvgPool(4,2,1)+BN(64)+LeakyReLU stages until spatial == 2
    stages = []
    nsize_i = NSIZE // 2
    while nsize_i > 2:
        stages.append(dict(gamma=jnp.ones((depth_in,), jnp.float32),
                           beta=jnp.zeros((depth_in,), jnp.float32)))
        nsize_i //= 2
    params['encoderconv'] = stages

    # encoderfc: Linear(depth_in*2*2, nz) + BN1d(nz) + Tanh   (jnp-side)
    params['encoderfc'] = dict(w=nrm((NZ, depth_in * 4)).T, b=nrm((NZ,)),
                               gamma=jnp.ones((NZ,), jnp.float32),
                               beta=jnp.zeros((NZ,), jnp.float32))
    # nlnet: Linear(2*nz, nz) + BN1d(nz) + Tanh                (jnp-side)
    params['nlnet'] = dict(w=nrm((NZ, 2 * NZ)).T, b=nrm((NZ,)),
                           gamma=jnp.ones((NZ,), jnp.float32),
                           beta=jnp.zeros((NZ,), jnp.float32))
    return params


# ------------------------- forward pass -------------------------
def apply_deconv_stack(layers, z):
    """z: (B, nz) latent -> NHWC feature map through the deconv stack."""
    B = z.shape[0]
    x = None
    for layer in layers:
        if layer['kind'] == 'first':
            x = (z @ layer['w'] + layer['b']).reshape(B, 4, 4, layer['cout'])
        else:
            x = deconv_s2_apply(x, layer['dense'], layer['cout'], act='none')
        x = batchnorm_nhwc(x, layer['gamma'], layer['beta'])
        x = jnp.maximum(x, 0.0)                    # ReLU
    return x


def netG_forward(params, inp):
    """inp: (ntimestep, batch, nz) — mirrors `input[i]` indexing of the module.
    All image tensors are NHWC internally; appended outputs are NCHW (PyTorch)."""
    T, B, _ = inp.shape
    hx = jnp.zeros((B, NZ), jnp.float32)
    cx = jnp.zeros((B, NZ), jnp.float32)
    outputsT, fgimgsT, fgmaskT = [], [], []
    bgc = fgc = canvas = None
    for i in range(T):
        hx, cx = lstm_cell(inp[i], hx, cx, params['lstm'])
        if i == 0:
            bgc = apply_deconv_stack(params['gbgc'], inp[i])          # (B,16,16,64)
            canvas = deconv_s2_apply(bgc, params['gbgi'], NC, act='tanh')  # (B,32,32,3)
            outputsT.append(canvas.transpose(0, 3, 1, 2))
        else:
            if T > 2 and i == 1:
                enc_in = bgc
            elif T > 2 and i > 1:
                enc_in = fgc
            else:
                enc_in = None
            if enc_in is not None:
                enc = apply_encoder_conv(params['encoderconv'], enc_in)
                enc = enc.transpose(0, 3, 1, 2).reshape(B, -1)   # PyTorch (C,H,W) flatten
                encfc = fc_bn_tanh(enc, params['encoderfc'])
                input4g = fc_bn_tanh(jnp.concatenate([hx, encfc], axis=1),
                                     params['nlnet'])
            else:
                input4g = hx
            fgc = apply_deconv_stack(params['gfgc'], input4g)
            # fused fgi+fgm head; tanh/sigmoid applied in the Pallas epilogue
            head = deconv_s2_apply(fgc, params['gfghead'], NC + 1, act='head')
            fgt = input4g @ params['gtransform']['w'] + params['gtransform']['b']
            theta = clamp_T(fgt).reshape(B, 2, 3)
            fgg = affine_grid(theta, NSIZE, NSIZE)
            canvas = stnm_composite(canvas, head, fgg)          # all NHWC, no transposes
            outputsT.append(canvas.transpose(0, 3, 1, 2))
            fgimgsT.append(head[..., :NC].transpose(0, 3, 1, 2))
            fgmaskT.append(head[..., NC:NC + 1].transpose(0, 3, 1, 2))
    return outputsT[T - 1], outputsT, fgimgsT, fgmaskT


# ------------------------- self-check -------------------------
def _selfcheck_deconv_s2():
    """Validate the sub-pixel weight regrouping + pixel shuffle against
    jax.lax.conv_general_dilated (the PyTorch ConvTranspose2d(k=4,s=2,p=1) ref)."""
    k1, k2, k3 = jax.random.split(jax.random.PRNGKey(42), 3)
    Cin, Cout, H = 32, 16, 8
    x = jax.random.normal(k1, (2, H, H, Cin), jnp.float32)
    w = 0.05 * jax.random.normal(k2, (Cin, Cout, 4, 4), jnp.float32)
    b = 0.05 * jax.random.normal(k3, (Cout,), jnp.float32)
    xq = x.astype(jnp.bfloat16).astype(jnp.float32)   # match kernel quantization
    wq = w.astype(jnp.bfloat16).astype(jnp.float32)
    got = deconv_s2_apply(xq, make_dense(_subpixel_weight(wq), jnp.tile(b, 4)), Cout)
    ref = jax.lax.conv_general_dilated(
        xq, jnp.flip(wq, axis=(2, 3)).transpose(2, 3, 0, 1),
        window_strides=(1, 1), padding=((2, 2), (2, 2)), lhs_dilation=(2, 2),
        dimension_numbers=('NHWC', 'HWIO', 'NHWC')) + b.reshape(1, 1, 1, -1)
    err = float(jnp.max(jnp.abs(got - ref)))
    assert err < 1e-2, f"deconv_s2 self-check failed: max abs err {err}"


# ------------------------- main -------------------------
if __name__ == "__main__":
    _selfcheck_deconv_s2()

    key = jax.random.PRNGKey(0)
    kp, kx = jax.random.split(key)
    params = init_params(kp)
    x = jax.random.normal(kx, (NTIMESTEP, BATCH, NZ), dtype=jnp.float32)

    fwd = jax.jit(lambda inp: netG_forward(params, inp))
    final, outputsT, fgimgsT, fgmaskT = fwd(x)
    jax.block_until_ready((final, outputsT, fgimgsT, fgmaskT))

    assert final.shape == (BATCH, NC, NSIZE, NSIZE)
    assert len(outputsT) == NTIMESTEP
    assert len(fgimgsT) == NTIMESTEP - 1 and len(fgmaskT) == NTIMESTEP - 1
    assert fgimgsT[0].shape == (BATCH, NC, NSIZE, NSIZE)
    assert fgmaskT[0].shape == (BATCH, 1, NSIZE, NSIZE)
    assert bool(jnp.all(jnp.isfinite(final)))
    print("KERNEL_OK")
</pallas_src>

<mosaic_0001>
module attributes {stable_mosaic.version = 11 : i64} {
  func.func @kernel(%arg0: i32, %arg1: memref<128x384xbf16, #tpu.memory_space<vmem>>, %arg2: memref<384x128xbf16, #tpu.memory_space<vmem>>, %arg3: memref<1x128xf32, #tpu.memory_space<vmem>>, %arg4: memref<128x64xf32, #tpu.memory_space<vmem>>) attributes {dimension_semantics = [#tpu.dimension_semantics<arbitrary>], iteration_bounds = array<i64: 1>, scalar_prefetch = 0 : i64, scratch_operands = 0 : i64, tpu.core_type = #tpu.core_type<tc>, window_params = [{pipeline_mode = #tpu.pipeline_mode<synchronous>, transform_indices = @transform_0, window_bounds = array<i64: 128, 384>}, {pipeline_mode = #tpu.pipeline_mode<synchronous>, transform_indices = @transform_1, window_bounds = array<i64: 384, 128>}, {pipeline_mode = #tpu.pipeline_mode<synchronous>, transform_indices = @transform_2, window_bounds = array<i64: 1, 128>}, {pipeline_mode = #tpu.pipeline_mode<synchronous>, transform_indices = @transform_3, window_bounds = array<i64: 128, 64>}]} {
    %c0 = arith.constant 0 : index
    %c0_0 = arith.constant 0 : index
    %0 = vector.load %arg1[%c0, %c0_0] : memref<128x384xbf16, #tpu.memory_space<vmem>>, vector<128x384xbf16>
    %c0_1 = arith.constant 0 : index
    %c0_2 = arith.constant 0 : index
    %1 = vector.load %arg2[%c0_1, %c0_2] : memref<384x128xbf16, #tpu.memory_space<vmem>>, vector<384x128xbf16>
    %cst = arith.constant dense<0.000000e+00> : vector<128x128xf32>
    %2 = tpu.matmul %0, %1, %cst {dimension_numbers = #tpu.dot_dimension_numbers<[1], [0], [0], [1], [0, 0, 1, 1], [], []>} : vector<128x384xbf16>, vector<384x128xbf16>, vector<128x128xf32> -> vector<128x128xf32>
    %c0_3 = arith.constant 0 : index
    %c0_4 = arith.constant 0 : index
    %3 = vector.load %arg3[%c0_3, %c0_4] : memref<1x128xf32, #tpu.memory_space<vmem>>, vector<1x128xf32>
    %4 = vector.broadcast %3 : vector<1x128xf32> to vector<128x128xf32>
    %5 = arith.addf %2, %4 : vector<128x128xf32>
    %6 = vector.extract_strided_slice %5 {offsets = [0, 0], sizes = [128, 64], strides = [1, 1]} : vector<128x128xf32> to vector<128x64xf32>
    %c0_5 = arith.constant 0 : index
    %c0_6 = arith.constant 0 : index
    %7 = vector.load %arg4[%c0_5, %c0_6] : memref<128x64xf32, #tpu.memory_space<vmem>>, vector<128x64xf32>
    tpu.vector_store %arg4[%c0_5, %c0_6], %6 {strides = array<i32>} : memref<128x64xf32, #tpu.memory_space<vmem>>, vector<128x64xf32>,
    return
  }
  func.func @transform_0(%arg0: i32) -> (i32, i32) {
    %c0_i32 = arith.constant 0 : i32
    %c0_i32_0 = arith.constant 0 : i32
    %c0_i32_1 = arith.constant 0 : i32
    return %c0_i32, %c0_i32_0 : i32, i32
  }
  func.func @transform_1(%arg0: i32) -> (i32, i32) {
    %c0_i32 = arith.constant 0 : i32
    %c0_i32_0 = arith.constant 0 : i32
    %c0_i32_1 = arith.constant 0 : i32
    return %c0_i32, %c0_i32_0 : i32, i32
  }
  func.func @transform_2(%arg0: i32) -> (i32, i32) {
    %c0_i32 = arith.constant 0 : i32
    %c0_i32_0 = arith.constant 0 : i32
    %c0_i32_1 = arith.constant 0 : i32
    return %c0_i32, %c0_i32_0 : i32, i32
  }
  func.func @transform_3(%arg0: i32) -> (i32, i32) {
    %c0_i32 = arith.constant 0 : i32
    %c0_i32_0 = arith.constant 0 : i32
    %c0_i32_1 = arith.constant 0 : i32
    return %c0_i32, %c0_i32_0 : i32, i32
  }
}

</mosaic_0001>

<llo_original>
// kernel: tpu_custom_call.1
$region0: #{tpu_custom_call.1}
  #allocation0 [shape = 'u32[]', space=smem, size = 0x4, offset = 0x4, fixed_abs, tag = 'smem constant byte address 0x4 - core index']
  #allocation1 [shape = 'u32[72,128]{1,0:T(1,128)}', space=vmem, size = 0x9000, scoped, tag = 'internal scratch']
  %s0 = inlined_call_operand.hbm [shape: bf16[128,384], index: 0, kind: input, shape index: {}]
  %s1 = inlined_call_operand.hbm [shape: bf16[384,128], index: 1, kind: input, shape index: {}]
  %s2 = inlined_call_operand.vmem [shape: f32[1,128], index: 2, kind: input, shape index: {}]
  %s3 = inlined_call_operand.vmem [shape: f32[128,64], index: 3, kind: output, shape index: {}]
  %s4 = sld [smem:[#allocation0]]
  $region30: #{tpu_custom_call.1} parent=0
    _
  %s6 = ssub.s32 1, %s4
  %s7 = scalar_select 0, %s6, %s4
  $region1: #{tpu_custom_call.1} parent=0
    #allocation2 [shape = 'u8[98304]{0}', space=vmem, size = 0x18000, scoped, tag = 'input window, operand 0, single buffered']
    #allocation3 [shape = 's32[1]{0}', space=sflag, size = 0x4, scoped, tag = 'scoped memory for tpu_custom_call.1']
    #allocation4 [shape = 'u8[98304]{0}', space=vmem, size = 0x18000, scoped, tag = 'input window, operand 1, single buffered']
    #allocation5 [shape = 's32[1]{0}', space=sflag, size = 0x4, scoped, tag = 'scoped memory for tpu_custom_call.1']
    %8 = vsyncpa [#allocation3], 0
    %9 = vsyncpa [#allocation5], 0
    // Predicated region
    $region2: #{tpu_custom_call.1} parent=1 // pred_check
      _
    $region3: #{tpu_custom_call.1} parent=1 // pred_check_branch
      %11 = sbr.rel (0) target = $region5
    $region4: #{tpu_custom_call.1} parent=1 // pred_region
      %13 = vsyncadd [#allocation3], 0
      %s14 = sshll.u32 %s0, 4
      %s15 = int_to_ptr.hbm [resolvable:$true] %s14
      %s16 = sshll.u32 [#allocation2], 4
      %s17 = int_to_ptr.vmem [resolvable:$true] %s16
      %22 = dma.hbm_to_vmem [thread:$0]  %s15, 3072, %s17, [#allocation3], 192, 192, 12
    $region5: #{tpu_custom_call.1} parent=1 // pred_fallthru
      _
    // Predicated region
    $region6: #{tpu_custom_call.1} parent=1 // pred_check
      _
    $region7: #{tpu_custom_call.1} parent=1 // pred_check_branch
      %24 = sbr.rel (0) target = $region9
    $region8: #{tpu_custom_call.1} parent=1 // pred_region
      %26 = vsyncadd [#allocation5], 0
      %s27 = sshll.u32 %s1, 4
      %s28 = int_to_ptr.hbm [resolvable:$true] %s27
      %s29 = sshll.u32 [#allocation4], 4
      %s30 = int_to_ptr.vmem [resolvable:$true] %s29
      %35 = dma.hbm_to_vmem [thread:$0]  %s28, 3072, %s30, [#allocation5], 64, 64, 4
    $region9: #{tpu_custom_call.1} parent=1 // pred_fallthru
      _
    // Predicated region
    $region10: #{tpu_custom_call.1} parent=1 // pred_check
      _
    $region11: #{tpu_custom_call.1} parent=1 // pred_check_branch
      %37 = sbr.rel (0) target = $region13
    $region12: #{tpu_custom_call.1} parent=1 // pred_region
      _
    $region13: #{tpu_custom_call.1} parent=1 // pred_fallthru
      _
    // Predicated region
    $region14: #{tpu_custom_call.1} parent=1 // pred_check
      _
    $region15: #{tpu_custom_call.1} parent=1 // pred_check_branch
      %39 = sbr.rel (0) target = $region17
    $region16: #{tpu_custom_call.1} parent=1 // pred_region
      %41 = dma.done [#allocation3], 3072
    $region17: #{tpu_custom_call.1} parent=1 // pred_fallthru
      _
    // Predicated region
    $region18: #{tpu_custom_call.1} parent=1 // pred_check
      _
    $region19: #{tpu_custom_call.1} parent=1 // pred_check_branch
      %43 = sbr.rel (0) target = $region21
    $region20: #{tpu_custom_call.1} parent=1 // pred_region
      %45 = dma.done [#allocation5], 3072
    $region21: #{tpu_custom_call.1} parent=1 // pred_fallthru
      _
    %v46 = vld [vmem:[#allocation2] sm:$0xff]
    %v47 = vld [vmem:[#allocation2 + $0x8] sm:$0xf]
    %v48 = vld [vmem:[#allocation2 + $0xc] sm:$0xff]
    %v49 = vld [vmem:[#allocation2 + $0x14] sm:$0xf]
    %v50 = vld [vmem:[#allocation2 + $0x18] sm:$0xff]
    %v51 = vld [vmem:[#allocation2 + $0x20] sm:$0xf]
    %v52 = vld [vmem:[#allocation2 + $0x24] sm:$0xff]
    %v53 = vld [vmem:[#allocation2 + $0x2c] sm:$0xf]
    %v54 = vld [vmem:[#allocation2 + $0x30] sm:$0xff]
    %v55 = vld [vmem:[#allocation2 + $0x38] sm:$0xf]
    %v56 = vld [vmem:[#allocation2 + $0x3c] sm:$0xff]
    %v57 = vld [vmem:[#allocation2 + $0x44] sm:$0xf]
    %v58 = vld [vmem:[#allocation2 + $0x48] sm:$0xff]
    %v59 = vld [vmem:[#allocation2 + $0x50] sm:$0xf]
    %v60 = vld [vmem:[#allocation2 + $0x54] sm:$0xff]
    %v61 = vld [vmem:[#allocation2 + $0x5c] sm:$0xf]
    %v62 = vld [vmem:[#allocation2 + $0x60] sm:$0xff]
    %v63 = vld [vmem:[#allocation2 + $0x68] sm:$0xf]
    %v64 = vld [vmem:[#allocation2 + $0x6c] sm:$0xff]
    %v65 = vld [vmem:[#allocation2 + $0x74] sm:$0xf]
    %v66 = vld [vmem:[#allocation2 + $0x78] sm:$0xff]
    %v67 = vld [vmem:[#allocation2 + $0x80] sm:$0xf]
    %v68 = vld [vmem:[#allocation2 + $0x84] sm:$0xff]
    %v69 = vld [vmem:[#allocation2 + $0x8c] sm:$0xf]
    %v70 = vld [vmem:[#allocation2 + $0x90] sm:$0xff]
    %v71 = vld [vmem:[#allocation2 + $0x98] sm:$0xf]
    %v72 = vld [vmem:[#allocation2 + $0x9c] sm:$0xff]
    %v73 = vld [vmem:[#allocation2 + $0xa4] sm:$0xf]
    %v74 = vld [vmem:[#allocation2 + $0xa8] sm:$0xff]
    %v75 = vld [vmem:[#allocation2 + $0xb0] sm:$0xf]
    %v76 = vld [vmem:[#allocation2 + $0xb4] sm:$0xff]
    %v77 = vld [vmem:[#allocation2 + $0xbc] sm:$0xf]
    %v78 = vld [vmem:[#allocation4] sm:$0xf]
    %v79 = vld [vmem:[#allocation4 + $0x4] sm:$0xf]
    %v80 = vld [vmem:[#allocation4 + $0x8] sm:$0xf]
    %v81 = vld [vmem:[#allocation4 + $0xc] sm:$0xf]
    %v82 = vld [vmem:[#allocation4 + $0x10] sm:$0xf]
    %v83 = vld [vmem:[#allocation4 + $0x14] sm:$0xf]
    %v84 = vld [vmem:[#allocation4 + $0x18] sm:$0xf]
    %v85 = vld [vmem:[#allocation4 + $0x1c] sm:$0xf]
    %v86 = vld [vmem:[#allocation4 + $0x20] sm:$0xf]
    %v87 = vld [vmem:[#allocation4 + $0x24] sm:$0xf]
    %v88 = vld [vmem:[#allocation4 + $0x28] sm:$0xf]
    %v89 = vld [vmem:[#allocation4 + $0x2c] sm:$0xf]
    %v90 = vld [vmem:[#allocation4 + $0x30] sm:$0xf]
    %v91 = vld [vmem:[#allocation4 + $0x34] sm:$0xf]
    %v92 = vld [vmem:[#allocation4 + $0x38] sm:$0xf]
    %v93 = vld [vmem:[#allocation4 + $0x3c] sm:$0xf]
    %v94 = vld [vmem:[#allocation4 + $0x40] sm:$0xf]
    %v95 = vld [vmem:[#allocation4 + $0x44] sm:$0xf]
    %v96 = vld [vmem:[#allocation4 + $0x48] sm:$0xf]
    %v97 = vld [vmem:[#allocation4 + $0x4c] sm:$0xf]
    %v98 = vld [vmem:[#allocation4 + $0x50] sm:$0xf]
    %v99 = vld [vmem:[#allocation4 + $0x54] sm:$0xf]
    %v100 = vld [vmem:[#allocation4 + $0x58] sm:$0xf]
    %v101 = vld [vmem:[#allocation4 + $0x5c] sm:$0xf]
    %v102 = vld [vmem:[#allocation4 + $0x60] sm:$0xf]
    %v103 = vld [vmem:[#allocation4 + $0x64] sm:$0xf]
    %v104 = vld [vmem:[#allocation4 + $0x68] sm:$0xf]
    %v105 = vld [vmem:[#allocation4 + $0x6c] sm:$0xf]
    %v106 = vld [vmem:[#allocation4 + $0x70] sm:$0xf]
    %v107 = vld [vmem:[#allocation4 + $0x74] sm:$0xf]
    %v108 = vld [vmem:[#allocation4 + $0x78] sm:$0xf]
    %v109 = vld [vmem:[#allocation4 + $0x7c] sm:$0xf]
    %v110 = vld [vmem:[#allocation4 + $0x80] sm:$0xf]
    %v111 = vld [vmem:[#allocation4 + $0x84] sm:$0xf]
    %v112 = vld [vmem:[#allocation4 + $0x88] sm:$0xf]
    %v113 = vld [vmem:[#allocation4 + $0x8c] sm:$0xf]
    %v114 = vld [vmem:[#allocation4 + $0x90] sm:$0xf]
    %v115 = vld [vmem:[#allocation4 + $0x94] sm:$0xf]
    %v116 = vld [vmem:[#allocation4 + $0x98] sm:$0xf]
    %v117 = vld [vmem:[#allocation4 + $0x9c] sm:$0xf]
    %v118 = vld [vmem:[#allocation4 + $0xa0] sm:$0xf]
    %v119 = vld [vmem:[#allocation4 + $0xa4] sm:$0xf]
    %v120 = vld [vmem:[#allocation4 + $0xa8] sm:$0xf]
    %v121 = vld [vmem:[#allocation4 + $0xac] sm:$0xf]
    %v122 = vld [vmem:[#allocation4 + $0xb0] sm:$0xf]
    %v123 = vld [vmem:[#allocation4 + $0xb4] sm:$0xf]
    %v124 = vld [vmem:[#allocation4 + $0xb8] sm:$0xf]
    %v125 = vld [vmem:[#allocation4 + $0xbc] sm:$0xf]
    %v126 = vld [vmem:[%s2] sm:$0x1]
    %v128 = vperm.slane %v126, 0
    %v162 = vunpack.c.l.b16 %v46
    %v163 = vunpack.c.h.b16 %v46
    %v164 = vunpack.c.l.b16 %v47
    %v165 = vunpack.c.l.b16 %v48
    %v166 = vunpack.c.h.b16 %v48
    %v167 = vunpack.c.l.b16 %v49
    %v168 = vunpack.c.l.b16 %v50
    %v169 = vunpack.c.h.b16 %v50
    %v170 = vunpack.c.l.b16 %v51
    %v171 = vunpack.c.l.b16 %v52
    %v172 = vunpack.c.h.b16 %v52
    %v173 = vunpack.c.l.b16 %v53
    %v174 = vunpack.c.l.b16 %v54
    %v175 = vunpack.c.h.b16 %v54
    %v176 = vunpack.c.l.b16 %v55
    %v177 = vunpack.c.l.b16 %v56
    %v178 = vunpack.c.h.b16 %v56
    %v179 = vunpack.c.l.b16 %v57
    %v180 = vunpack.c.l.b16 %v58
    %v181 = vunpack.c.h.b16 %v58
    %v182 = vunpack.c.l.b16 %v59
    %v183 = vunpack.c.l.b16 %v60
    %v184 = vunpack.c.h.b16 %v60
    %v185 = vunpack.c.l.b16 %v61
    %v186 = vunpack.c.l.b16 %v62
    %v187 = vunpack.c.h.b16 %v62
    %v188 = vunpack.c.l.b16 %v63
    %v189 = vunpack.c.l.b16 %v64
    %v190 = vunpack.c.h.b16 %v64
    %v191 = vunpack.c.l.b16 %v65
    %v192 = vunpack.c.l.b16 %v66
    %v193 = vunpack.c.h.b16 %v66
    %v194 = vunpack.c.l.b16 %v67
    %v195 = vunpack.c.l.b16 %v68
    %v196 = vunpack.c.h.b16 %v68
    %v197 = vunpack.c.l.b16 %v69
    %v198 = vunpack.c.l.b16 %v70
    %v199 = vunpack.c.h.b16 %v70
    %v200 = vunpack.c.l.b16 %v71
    %v201 = vunpack.c.l.b16 %v72
    %v202 = vunpack.c.h.b16 %v72
    %v203 = vunpack.c.l.b16 %v73
    %v204 = vunpack.c.l.b16 %v74
    %v205 = vunpack.c.h.b16 %v74
    %v206 = vunpack.c.l.b16 %v75
    %v207 = vunpack.c.l.b16 %v76
    %v208 = vunpack.c.h.b16 %v76
    %v209 = vunpack.c.l.b16 %v77
    %v210 = vpack.c.b16 %v165, %v162
    %v211 = vpack.c.b16 %v166, %v163
    %v212 = vpack.c.b16 %v167, %v164
    %v213 = vpack.c.b16 %v171, %v168
    %v214 = vpack.c.b16 %v172, %v169
    %v215 = vpack.c.b16 %v173, %v170
    %v216 = vpack.c.b16 %v177, %v174
    %v217 = vpack.c.b16 %v178, %v175
    %v218 = vpack.c.b16 %v179, %v176
    %v219 = vpack.c.b16 %v183, %v180
    %v220 = vpack.c.b16 %v184, %v181
    %v221 = vpack.c.b16 %v185, %v182
    %v222 = vpack.c.b16 %v189, %v186
    %v223 = vpack.c.b16 %v190, %v187
    %v224 = vpack.c.b16 %v191, %v188
    %v225 = vpack.c.b16 %v195, %v192
    %v226 = vpack.c.b16 %v196, %v193
    %v227 = vpack.c.b16 %v197, %v194
    %v228 = vpack.c.b16 %v201, %v198
    %v229 = vpack.c.b16 %v202, %v199
    %v230 = vpack.c.b16 %v203, %v200
    %v231 = vpack.c.b16 %v207, %v204
    %v232 = vpack.c.b16 %v208, %v205
    %v233 = vpack.c.b16 %v209, %v206
    %v306 = vunpack.c.l.b16 %v78
    %v307 = vunpack.c.l.b16 %v79
    %v308 = vunpack.c.l.b16 %v80
    %v309 = vunpack.c.l.b16 %v81
    %v310 = vunpack.c.l.b16 %v82
    %v311 = vunpack.c.l.b16 %v83
    %v312 = vunpack.c.l.b16 %v84
    %v313 = vunpack.c.l.b16 %v85
    %v314 = vunpack.c.l.b16 %v86
    %v315 = vunpack.c.l.b16 %v87
    %v316 = vunpack.c.l.b16 %v88
    %v317 = vunpack.c.l.b16 %v89
    %v318 = vunpack.c.l.b16 %v90
    %v319 = vunpack.c.l.b16 %v91
    %v320 = vunpack.c.l.b16 %v92
    %v321 = vunpack.c.l.b16 %v93
    %v322 = vunpack.c.l.b16 %v94
    %v323 = vunpack.c.l.b16 %v95
    %v324 = vunpack.c.l.b16 %v96
    %v325 = vunpack.c.l.b16 %v97
    %v326 = vunpack.c.l.b16 %v98
    %v327 = vunpack.c.l.b16 %v99
    %v328 = vunpack.c.l.b16 %v100
    %v329 = vunpack.c.l.b16 %v101
    %v330 = vunpack.c.l.b16 %v102
    %v331 = vunpack.c.l.b16 %v103
    %v332 = vunpack.c.l.b16 %v104
    %v333 = vunpack.c.l.b16 %v105
    %v334 = vunpack.c.l.b16 %v106
    %v335 = vunpack.c.l.b16 %v107
    %v336 = vunpack.c.l.b16 %v108
    %v337 = vunpack.c.l.b16 %v109
    %v338 = vunpack.c.l.b16 %v110
    %v339 = vunpack.c.l.b16 %v111
    %v340 = vunpack.c.l.b16 %v112
    %v341 = vunpack.c.l.b16 %v113
    %v342 = vunpack.c.l.b16 %v114
    %v343 = vunpack.c.l.b16 %v115
    %v344 = vunpack.c.l.b16 %v116
    %v345 = vunpack.c.l.b16 %v117
    %v346 = vunpack.c.l.b16 %v118
    %v347 = vunpack.c.l.b16 %v119
    %v348 = vunpack.c.l.b16 %v120
    %v349 = vunpack.c.l.b16 %v121
    %v350 = vunpack.c.l.b16 %v122
    %v351 = vunpack.c.l.b16 %v123
    %v352 = vunpack.c.l.b16 %v124
    %v353 = vunpack.c.l.b16 %v125
    %v354 = vpack.c.b16 %v307, %v306
    %v355 = vpack.c.b16 %v309, %v308
    %v356 = vpack.c.b16 %v311, %v310
    %v357 = vpack.c.b16 %v313, %v312
    %v358 = vpack.c.b16 %v315, %v314
    %v359 = vpack.c.b16 %v317, %v316
    %v360 = vpack.c.b16 %v319, %v318
    %v361 = vpack.c.b16 %v321, %v320
    %v362 = vpack.c.b16 %v323, %v322
    %v363 = vpack.c.b16 %v325, %v324
    %v364 = vpack.c.b16 %v327, %v326
    %v365 = vpack.c.b16 %v329, %v328
    %v366 = vpack.c.b16 %v331, %v330
    %v367 = vpack.c.b16 %v333, %v332
    %v368 = vpack.c.b16 %v335, %v334
    %v369 = vpack.c.b16 %v337, %v336
    %v370 = vpack.c.b16 %v339, %v338
    %v371 = vpack.c.b16 %v341, %v340
    %v372 = vpack.c.b16 %v343, %v342
    %v373 = vpack.c.b16 %v345, %v344
    %v374 = vpack.c.b16 %v347, %v346
    %v375 = vpack.c.b16 %v349, %v348
    %v376 = vpack.c.b16 %v351, %v350
    %v377 = vpack.c.b16 %v353, %v352
    %402 = vmatpush.bf16.msra.mxu0 %v361
    %403 = vmatpush.bf16.msra.mxu0 %v360
    %404 = vmatpush.bf16.msra.mxu0 %v359
    %405 = vmatpush.bf16.msra.mxu0 %v358
    %406 = vmatpush.bf16.msra.mxu0 %v357
    %407 = vmatpush.bf16.msra.mxu0 %v356
    %408 = vmatpush.bf16.msra.mxu0 %v355
    %409 = vmatpush.bf16.msra.mxu0 %v354
    %410 = vmatmul.bf16.gmra.mxu0 %v210
    %v411 = vpop.f32.mrf.mxu0
    %v412 = vadd.f32 %v128, %v411
    %v413 = vpop.f32.mrf.mxu0
    %v414 = vadd.f32 %v128, %v413
    %415 = vmatmul.bf16.gmra.mxu0 %v213
    %v416 = vpop.f32.mrf.mxu0
    %v417 = vadd.f32 %v128, %v416
    %v418 = vpop.f32.mrf.mxu0
    %v419 = vadd.f32 %v128, %v418
    %420 = vmatmul.bf16.gmra.mxu0 %v216
    %v421 = vpop.f32.mrf.mxu0
    %v422 = vadd.f32 %v128, %v421
    %v423 = vpop.f32.mrf.mxu0
    %v424 = vadd.f32 %v128, %v423
    %425 = vmatmul.bf16.gmra.mxu0 %v219
    %v426 = vpop.f32.mrf.mxu0
    %v427 = vadd.f32 %v128, %v426
    %v428 = vpop.f32.mrf.mxu0
    %v429 = vadd.f32 %v128, %v428
    %430 = vmatmul.bf16.gmra.mxu0 %v222
    %v431 = vpop.f32.mrf.mxu0
    %v432 = vadd.f32 %v128, %v431
    %v433 = vpop.f32.mrf.mxu0
    %v434 = vadd.f32 %v128, %v433
    %435 = vmatmul.bf16.gmra.mxu0 %v225
    %v436 = vpop.f32.mrf.mxu0
    %v437 = vadd.f32 %v128, %v436
    %v438 = vpop.f32.mrf.mxu0
    %v439 = vadd.f32 %v128, %v438
    %440 = vmatmul.bf16.gmra.mxu0 %v228
    %v441 = vpop.f32.mrf.mxu0
    %v442 = vadd.f32 %v128, %v441
    %v443 = vpop.f32.mrf.mxu0
    %v444 = vadd.f32 %v128, %v443
    %445 = vmatmul.bf16.gmra.mxu0 %v231
    %v446 = vpop.f32.mrf.mxu0
    %v447 = vadd.f32 %v128, %v446
    %v448 = vpop.f32.mrf.mxu0
    %v449 = vadd.f32 %v128, %v448
    %450 = vdwg.mxu0
    %451 = vmatpush.bf16.msra.mxu0 %v369
    %452 = vmatpush.bf16.msra.mxu0 %v368
    %453 = vmatpush.bf16.msra.mxu0 %v367
    %454 = vmatpush.bf16.msra.mxu0 %v366
    %455 = vmatpush.bf16.msra.mxu0 %v365
    %456 = vmatpush.bf16.msra.mxu0 %v364
    %457 = vmatpush.bf16.msra.mxu0 %v363
    %458 = vmatpush.bf16.msra.mxu0 %v362
    %459 = vmatmul.bf16.gmra.mxu0 %v211
    %v460 = vpop.f32.mrf.mxu0
    %v461 = vadd.f32 %v412, %v460
    %v462 = vpop.f32.mrf.mxu0
    %v463 = vadd.f32 %v414, %v462
    %464 = vmatmul.bf16.gmra.mxu0 %v214
    %v465 = vpop.f32.mrf.mxu0
    %v466 = vadd.f32 %v417, %v465
    %v467 = vpop.f32.mrf.mxu0
    %v468 = vadd.f32 %v419, %v467
    %469 = vmatmul.bf16.gmra.mxu0 %v217
    %v470 = vpop.f32.mrf.mxu0
    %v471 = vadd.f32 %v422, %v470
    %v472 = vpop.f32.mrf.mxu0
    %v473 = vadd.f32 %v424, %v472
    %474 = vmatmul.bf16.gmra.mxu0 %v220
    %v475 = vpop.f32.mrf.mxu0
    %v476 = vadd.f32 %v427, %v475
    %v477 = vpop.f32.mrf.mxu0
    %v478 = vadd.f32 %v429, %v477
    %479 = vmatmul.bf16.gmra.mxu0 %v223
    %v480 = vpop.f32.mrf.mxu0
    %v481 = vadd.f32 %v432, %v480
    %v482 = vpop.f32.mrf.mxu0
    %v483 = vadd.f32 %v434, %v482
    %484 = vmatmul.bf16.gmra.mxu0 %v226
    %v485 = vpop.f32.mrf.mxu0
    %v486 = vadd.f32 %v437, %v485
    %v487 = vpop.f32.mrf.mxu0
    %v488 = vadd.f32 %v439, %v487
    %489 = vmatmul.bf16.gmra.mxu0 %v229
    %v490 = vpop.f32.mrf.mxu0
    %v491 = vadd.f32 %v442, %v490
    %v492 = vpop.f32.mrf.mxu0
    %v493 = vadd.f32 %v444, %v492
    %494 = vmatmul.bf16.gmra.mxu0 %v232
    %v495 = vpop.f32.mrf.mxu0
    %v496 = vadd.f32 %v447, %v495
    %v497 = vpop.f32.mrf.mxu0
    %v498 = vadd.f32 %v449, %v497
    %499 = vdwg.mxu0
    %500 = vmatpush.bf16.msra.mxu0 %v377
    %501 = vmatpush.bf16.msra.mxu0 %v376
    %502 = vmatpush.bf16.msra.mxu0 %v375
    %503 = vmatpush.bf16.msra.mxu0 %v374
    %504 = vmatpush.bf16.msra.mxu0 %v373
    %505 = vmatpush.bf16.msra.mxu0 %v372
    %506 = vmatpush.bf16.msra.mxu0 %v371
    %507 = vmatpush.bf16.msra.mxu0 %v370
    %508 = vmatmul.bf16.gmra.mxu0 %v212
    %v509 = vpop.f32.mrf.mxu0
    %v510 = vadd.f32 %v461, %v509
    %v511 = vpop.f32.mrf.mxu0
    %v512 = vadd.f32 %v463, %v511
    %513 = vmatmul.bf16.gmra.mxu0 %v215
    %v514 = vpop.f32.mrf.mxu0
    %v515 = vadd.f32 %v466, %v514
    %v516 = vpop.f32.mrf.mxu0
    %v517 = vadd.f32 %v468, %v516
    %518 = vmatmul.bf16.gmra.mxu0 %v218
    %v519 = vpop.f32.mrf.mxu0
    %v520 = vadd.f32 %v471, %v519
    %v521 = vpop.f32.mrf.mxu0
    %v522 = vadd.f32 %v473, %v521
    %523 = vmatmul.bf16.gmra.mxu0 %v221
    %v524 = vpop.f32.mrf.mxu0
    %v525 = vadd.f32 %v476, %v524
    %v526 = vpop.f32.mrf.mxu0
    %v527 = vadd.f32 %v478, %v526
    %528 = vmatmul.bf16.gmra.mxu0 %v224
    %v529 = vpop.f32.mrf.mxu0
    %v530 = vadd.f32 %v481, %v529
    %v531 = vpop.f32.mrf.mxu0
    %v532 = vadd.f32 %v483, %v531
    %533 = vmatmul.bf16.gmra.mxu0 %v227
    %v534 = vpop.f32.mrf.mxu0
    %v535 = vadd.f32 %v486, %v534
    %v536 = vpop.f32.mrf.mxu0
    %v537 = vadd.f32 %v488, %v536
    %538 = vmatmul.bf16.gmra.mxu0 %v230
    %v539 = vpop.f32.mrf.mxu0
    %v540 = vadd.f32 %v491, %v539
    %v541 = vpop.f32.mrf.mxu0
    %v542 = vadd.f32 %v493, %v541
    %543 = vmatmul.bf16.gmra.mxu0 %v233
    %v544 = vpop.f32.mrf.mxu0
    %v545 = vadd.f32 %v496, %v544
    %v546 = vpop.f32.mrf.mxu0
    %v547 = vadd.f32 %v498, %v546
    %548 = vdwg.mxu0
    %vm549 = vcmask 523264
    %550 = vst.msk [vmem:[%s3] sm:$0xff] %vm549, %v510
    %551 = vst.msk [vmem:[%s3 + $0x8] sm:$0xff] %vm549, %v512
    %552 = vst.msk [vmem:[%s3 + $0x10] sm:$0xff] %vm549, %v515
    %553 = vst.msk [vmem:[%s3 + $0x18] sm:$0xff] %vm549, %v517
    %554 = vst.msk [vmem:[%s3 + $0x20] sm:$0xff] %vm549, %v520
    %555 = vst.msk [vmem:[%s3 + $0x28] sm:$0xff] %vm549, %v522
    %556 = vst.msk [vmem:[%s3 + $0x30] sm:$0xff] %vm549, %v525
    %557 = vst.msk [vmem:[%s3 + $0x38] sm:$0xff] %vm549, %v527
    %558 = vst.msk [vmem:[%s3 + $0x40] sm:$0xff] %vm549, %v530
    %559 = vst.msk [vmem:[%s3 + $0x48] sm:$0xff] %vm549, %v532
    %560 = vst.msk [vmem:[%s3 + $0x50] sm:$0xff] %vm549, %v535
    %561 = vst.msk [vmem:[%s3 + $0x58] sm:$0xff] %vm549, %v537
    %562 = vst.msk [vmem:[%s3 + $0x60] sm:$0xff] %vm549, %v540
    %563 = vst.msk [vmem:[%s3 + $0x68] sm:$0xff] %vm549, %v542
    %564 = vst.msk [vmem:[%s3 + $0x70] sm:$0xff] %vm549, %v545
    %565 = vst.msk [vmem:[%s3 + $0x78] sm:$0xff] %vm549, %v547
    // Predicated region
    $region22: #{tpu_custom_call.1} parent=1 // pred_check
      _
    $region23: #{tpu_custom_call.1} parent=1 // pred_check_branch
      %567 = sbr.rel (0) target = $region25
    $region24: #{tpu_custom_call.1} parent=1 // pred_region
      _
    $region25: #{tpu_custom_call.1} parent=1 // pred_fallthru
      _
    // Predicated region
    $region26: #{tpu_custom_call.1} parent=1 // pred_check
      _
    $region27: #{tpu_custom_call.1} parent=1 // pred_check_branch
      %569 = sbr.rel (0) target = $region29
    $region28: #{tpu_custom_call.1} parent=1 // pred_region
      _
    $region29: #{tpu_custom_call.1} parent=1 // pred_fallthru
      _
    %570 = vsyncpa [#allocation3], 1
    %571 = vsyncpa [#allocation5], 1

</llo_original>
